<compile_context>
chip_gen: v5e
topology: v5e:2x2
jax: 0.10.0
libtpu: 0.0.40
codegen_flags: <defaults>
</compile_context>

<pallas_src>
import jax
import jax.numpy as jnp
from jax import lax
from jax.experimental import pallas as pl
from jax.experimental.pallas import tpu as pltpu


def dws_block(x_nchw, dw_weight, gamma1, beta1, mean1, var1,
              pw_weight, pw_bias, gamma2, beta2, mean2, var2, eps=1e-5):
    """Equivalent of DWSBlock.forward (inference-mode BN).

    x_nchw:    (N, Cin, H, W) float32
    dw_weight: (Cin, 1, 3, 3)    depthwise conv weight (groups=Cin, bias=False)
    pw_weight: (Cout, Cin, 1, 1) pointwise conv weight; pw_bias: (Cout,)
    returns:   (N, Cout, H, W) float32
    """
    N, Cin, H, W = x_nchw.shape
    Cout = pw_weight.shape[0]
    WC = W * Cin              # lanes of the depthwise / matmul-LHS stage
    WCo = W * Cout            # lanes of the output stage (128 here)
    Hp = H + 2                # padded rows per image

    # ---- parameter folding (tiny, wrapper side) ----
    s1 = gamma1 / jnp.sqrt(var1 + eps)                               # (Cin,)
    wdw9 = (dw_weight[:, 0].reshape(Cin, 9) * s1[:, None]).T         # (9, Cin)
    b1 = beta1 - mean1 * s1                                          # (Cin,)
    s2 = gamma2 / jnp.sqrt(var2 + eps)                               # (Cout,)
    wp = (pw_weight[:, :, 0, 0] * s2[:, None]).T                     # (Cin, Cout)
    b2 = pw_bias * s2 + beta2 - mean2 * s2                           # (Cout,)

    # Lane-tiled / block-diagonal forms for the (w, c)-interleaved lane layout.
    wdw_t = jnp.tile(wdw9, (1, W))                                   # (9, WC)
    b1_t = jnp.tile(b1, W).reshape(1, WC)
    b2_t = jnp.tile(b2, W).reshape(1, WCo)
    bd = (jnp.eye(W, dtype=jnp.float32)[:, None, :, None] *
          wp[None, :, None, :]).reshape(WC, WCo).astype(jnp.bfloat16)

    # NCHW -> NHWC -> (N*H, W*Cin): H on sublanes (stacked over images),
    # (w, c) interleaved on lanes.
    x_flat = jnp.transpose(x_nchw, (0, 2, 3, 1)).reshape(N * H, WC)

    def kernel(x_ref, wdw_ref, bd_ref, b1_ref, b2_ref, o_ref,
               xpad_ref, y1_ref):
        # x_ref:    (N*H, WC)            whole batch, (w,c) on lanes
        # wdw_ref:  (9, WC)              depthwise taps (BN1 scale folded)
        # bd_ref:   (WC, WCo)            block-diag pointwise weight (bf16)
        # b1_ref:   (1, WC)              folded BN1 bias
        # b2_ref:   (1, WCo)             folded pointwise-bias + BN2 bias
        # o_ref:    (N*H, WCo)           lane/sublane-dense output slab
        # xpad_ref: (N*(H+2), (W+2)*Cin) f32 scratch, zero-padded batch slab
        # y1_ref:   (N*H, WC)            f32 scratch, compacted stage-1 output

        # Zero-padded batch slab in VMEM: image n occupies padded rows
        # [n*Hp, (n+1)*Hp) with a 1-row / 1-pixel zero border.
        xpad_ref[...] = jnp.zeros_like(xpad_ref)
        for n in range(N):
            xpad_ref[n * Hp + 1:n * Hp + 1 + H, Cin:Cin + WC] = (
                x_ref[n * H:(n + 1) * H, :])

        # Depthwise 3x3 (BN1 scale folded into the taps): 9 statically shifted
        # elementwise MACs on the VPU over the whole padded batch domain.
        R = N * Hp - 2
        acc = jnp.zeros((R, WC), jnp.float32)
        for t in range(9):
            dy, dx = divmod(t, 3)
            acc = acc + (xpad_ref[dy:dy + R, dx * Cin:dx * Cin + WC]
                         * wdw_ref[t:t + 1, :])

        # BN1 bias + ReLU, then compact the N valid H-row slabs (dropping the
        # 2 junk rows straddling each image boundary) into (N*H, WC).
        y1 = jnp.maximum(acc + b1_ref[...], 0.0)
        for n in range(N):
            y1_ref[n * H:(n + 1) * H, :] = y1[n * Hp:n * Hp + H, :]

        # Pointwise 1x1 conv + BN2 scale as a single bf16 MXU matmul against
        # the block-diagonal (WC, WCo) weight (K = WC), producing a lane-dense
        # (N*H, WCo) tile directly; f32 accumulation on the MXU.
        out = jnp.dot(y1_ref[...].astype(jnp.bfloat16), bd_ref[...],
                      preferred_element_type=jnp.float32)
        o_ref[...] = jnp.maximum(out + b2_ref[...], 0.0).astype(o_ref.dtype)

    out_flat = pl.pallas_call(
        kernel,
        out_shape=jax.ShapeDtypeStruct((N * H, WCo), x_nchw.dtype),
        grid_spec=pltpu.PrefetchScalarGridSpec(
            num_scalar_prefetch=0,
            grid=(1,),
            in_specs=[
                pl.BlockSpec((N * H, WC), lambda i: (0, 0)),
                pl.BlockSpec((9, WC), lambda i: (0, 0)),
                pl.BlockSpec((WC, WCo), lambda i: (0, 0)),
                pl.BlockSpec((1, WC), lambda i: (0, 0)),
                pl.BlockSpec((1, WCo), lambda i: (0, 0)),
            ],
            out_specs=pl.BlockSpec((N * H, WCo), lambda i: (0, 0)),
            scratch_shapes=[
                pltpu.VMEM((N * Hp, (W + 2) * Cin), jnp.float32),
                pltpu.VMEM((N * H, WC), jnp.float32),
            ],
        ),
        compiler_params=pltpu.CompilerParams(
            dimension_semantics=("arbitrary",)),
    )(x_flat, wdw_t, bd, b1_t, b2_t)

    return jnp.transpose(out_flat.reshape(N, H, W, Cout), (0, 3, 1, 2))


def _reference(x, dw_weight, g1, be1, m1, v1, pw_weight, pw_bias,
               g2, be2, m2, v2, eps=1e-5):
    Cin = x.shape[1]
    y = lax.conv_general_dilated(
        x, dw_weight, (1, 1), ((1, 1), (1, 1)),
        dimension_numbers=("NCHW", "OIHW", "NCHW"), feature_group_count=Cin)
    s1 = g1 / jnp.sqrt(v1 + eps)
    y = y * s1[None, :, None, None] + (be1 - m1 * s1)[None, :, None, None]
    y = jnp.maximum(y, 0.0)
    y = lax.conv_general_dilated(
        y, pw_weight, (1, 1), ((0, 0), (0, 0)),
        dimension_numbers=("NCHW", "OIHW", "NCHW"))
    y = y + pw_bias[None, :, None, None]
    s2 = g2 / jnp.sqrt(v2 + eps)
    y = y * s2[None, :, None, None] + (be2 - m2 * s2)[None, :, None, None]
    return jnp.maximum(y, 0.0)


if __name__ == "__main__":
    # Small shapes consistent with the module: N=2, Cin=4, Cout=8, H=W=16.
    N, Cin, Cout, H, W = 2, 4, 8, 16, 16

    key = jax.random.PRNGKey(0)
    ks = jax.random.split(key, 12)

    x = jax.random.normal(ks[0], (N, Cin, H, W), jnp.float32)
    dw_weight = 0.2 * jax.random.normal(ks[1], (Cin, 1, 3, 3), jnp.float32)
    gamma1 = 1.0 + 0.1 * jax.random.normal(ks[2], (Cin,), jnp.float32)
    beta1 = 0.1 * jax.random.normal(ks[3], (Cin,), jnp.float32)
    mean1 = 0.1 * jax.random.normal(ks[4], (Cin,), jnp.float32)
    var1 = jax.random.uniform(ks[5], (Cin,), jnp.float32, 0.5, 1.5)
    pw_weight = 0.2 * jax.random.normal(ks[6], (Cout, Cin, 1, 1), jnp.float32)
    pw_bias = 0.1 * jax.random.normal(ks[7], (Cout,), jnp.float32)
    gamma2 = 1.0 + 0.1 * jax.random.normal(ks[8], (Cout,), jnp.float32)
    beta2 = 0.1 * jax.random.normal(ks[9], (Cout,), jnp.float32)
    mean2 = 0.1 * jax.random.normal(ks[10], (Cout,), jnp.float32)
    var2 = jax.random.uniform(ks[11], (Cout,), jnp.float32, 0.5, 1.5)

    out = dws_block(x, dw_weight, gamma1, beta1, mean1, var1,
                    pw_weight, pw_bias, gamma2, beta2, mean2, var2)
    out = jax.block_until_ready(out)

    ref = _reference(x, dw_weight, gamma1, beta1, mean1, var1,
                     pw_weight, pw_bias, gamma2, beta2, mean2, var2)
    assert out.shape == (N, Cout, H, W)
    # bf16 MXU inputs for the pointwise matmul -> slightly loosened tolerance.
    assert jnp.allclose(out, ref, atol=2e-2, rtol=2e-2)

    print("KERNEL_OK")
</pallas_src>

<mosaic_0001>
module attributes {stable_mosaic.version = 11 : i64} {
  func.func @kernel(%arg0: i32, %arg1: memref<32x64xf32, #tpu.memory_space<vmem>>, %arg2: memref<9x64xf32, #tpu.memory_space<vmem>>, %arg3: memref<64x128xbf16, #tpu.memory_space<vmem>>, %arg4: memref<1x64xf32, #tpu.memory_space<vmem>>, %arg5: memref<1x128xf32, #tpu.memory_space<vmem>>, %arg6: memref<32x128xf32, #tpu.memory_space<vmem>>, %arg7: memref<36x72xf32, #tpu.memory_space<vmem>>, %arg8: memref<32x64xf32, #tpu.memory_space<vmem>>) attributes {dimension_semantics = [#tpu.dimension_semantics<arbitrary>], iteration_bounds = array<i64: 1>, scalar_prefetch = 0 : i64, scratch_operands = 2 : i64, tpu.core_type = #tpu.core_type<tc>, window_params = [{pipeline_mode = #tpu.pipeline_mode<synchronous>, transform_indices = @transform_0, window_bounds = array<i64: 32, 64>}, {pipeline_mode = #tpu.pipeline_mode<synchronous>, transform_indices = @transform_1, window_bounds = array<i64: 9, 64>}, {pipeline_mode = #tpu.pipeline_mode<synchronous>, transform_indices = @transform_2, window_bounds = array<i64: 64, 128>}, {pipeline_mode = #tpu.pipeline_mode<synchronous>, transform_indices = @transform_3, window_bounds = array<i64: 1, 64>}, {pipeline_mode = #tpu.pipeline_mode<synchronous>, transform_indices = @transform_4, window_bounds = array<i64: 1, 128>}, {pipeline_mode = #tpu.pipeline_mode<synchronous>, transform_indices = @transform_5, window_bounds = array<i64: 32, 128>}]} {
    %cst = arith.constant 0.000000e+00 : f32
    %0 = vector.broadcast %cst : f32 to vector<36x72xf32>
    %c0 = arith.constant 0 : index
    %c0_0 = arith.constant 0 : index
    %1 = vector.load %arg7[%c0, %c0_0] : memref<36x72xf32, #tpu.memory_space<vmem>>, vector<36x72xf32>
    tpu.vector_store %arg7[%c0, %c0_0], %0 {strides = array<i32>} : memref<36x72xf32, #tpu.memory_space<vmem>>, vector<36x72xf32>,
    %c0_1 = arith.constant 0 : index
    %c0_2 = arith.constant 0 : index
    %2 = vector.load %arg1[%c0_1, %c0_2] : memref<32x64xf32, #tpu.memory_space<vmem>>, vector<16x64xf32>
    %c1 = arith.constant 1 : index
    %c4 = arith.constant 4 : index
    %3 = vector.load %arg7[%c1, %c4] : memref<36x72xf32, #tpu.memory_space<vmem>>, vector<16x64xf32>
    tpu.vector_store %arg7[%c1, %c4], %2 {strides = array<i32>} : memref<36x72xf32, #tpu.memory_space<vmem>>, vector<16x64xf32>,
    %c16 = arith.constant 16 : index
    %c0_3 = arith.constant 0 : index
    %4 = vector.load %arg1[%c16, %c0_3] : memref<32x64xf32, #tpu.memory_space<vmem>>, vector<16x64xf32>
    %c19 = arith.constant 19 : index
    %c4_4 = arith.constant 4 : index
    %5 = vector.load %arg7[%c19, %c4_4] : memref<36x72xf32, #tpu.memory_space<vmem>>, vector<16x64xf32>
    tpu.vector_store %arg7[%c19, %c4_4], %4 {strides = array<i32>} : memref<36x72xf32, #tpu.memory_space<vmem>>, vector<16x64xf32>,
    %cst_5 = arith.constant 0.000000e+00 : f32
    %6 = vector.broadcast %cst_5 : f32 to vector<34x64xf32>
    %c0_6 = arith.constant 0 : index
    %c0_7 = arith.constant 0 : index
    %7 = vector.load %arg7[%c0_6, %c0_7] : memref<36x72xf32, #tpu.memory_space<vmem>>, vector<34x64xf32>
    %c0_8 = arith.constant 0 : index
    %c0_9 = arith.constant 0 : index
    %8 = vector.load %arg2[%c0_8, %c0_9] : memref<9x64xf32, #tpu.memory_space<vmem>>, vector<1x64xf32>
    %9 = vector.broadcast %8 : vector<1x64xf32> to vector<34x64xf32>
    %10 = arith.mulf %7, %9 : vector<34x64xf32>
    %11 = arith.addf %6, %10 : vector<34x64xf32>
    %c0_10 = arith.constant 0 : index
    %c4_11 = arith.constant 4 : index
    %12 = vector.load %arg7[%c0_10, %c4_11] : memref<36x72xf32, #tpu.memory_space<vmem>>, vector<34x64xf32>
    %c1_12 = arith.constant 1 : index
    %c0_13 = arith.constant 0 : index
    %13 = vector.load %arg2[%c1_12, %c0_13] : memref<9x64xf32, #tpu.memory_space<vmem>>, vector<1x64xf32>
    %14 = vector.broadcast %13 : vector<1x64xf32> to vector<34x64xf32>
    %15 = arith.mulf %12, %14 : vector<34x64xf32>
    %16 = arith.addf %11, %15 : vector<34x64xf32>
    %c0_14 = arith.constant 0 : index
    %c8 = arith.constant 8 : index
    %17 = vector.load %arg7[%c0_14, %c8] : memref<36x72xf32, #tpu.memory_space<vmem>>, vector<34x64xf32>
    %c2 = arith.constant 2 : index
    %c0_15 = arith.constant 0 : index
    %18 = vector.load %arg2[%c2, %c0_15] : memref<9x64xf32, #tpu.memory_space<vmem>>, vector<1x64xf32>
    %19 = vector.broadcast %18 : vector<1x64xf32> to vector<34x64xf32>
    %20 = arith.mulf %17, %19 : vector<34x64xf32>
    %21 = arith.addf %16, %20 : vector<34x64xf32>
    %c1_16 = arith.constant 1 : index
    %c0_17 = arith.constant 0 : index
    %22 = vector.load %arg7[%c1_16, %c0_17] : memref<36x72xf32, #tpu.memory_space<vmem>>, vector<34x64xf32>
    %c3 = arith.constant 3 : index
    %c0_18 = arith.constant 0 : index
    %23 = vector.load %arg2[%c3, %c0_18] : memref<9x64xf32, #tpu.memory_space<vmem>>, vector<1x64xf32>
    %24 = vector.broadcast %23 : vector<1x64xf32> to vector<34x64xf32>
    %25 = arith.mulf %22, %24 : vector<34x64xf32>
    %26 = arith.addf %21, %25 : vector<34x64xf32>
    %c1_19 = arith.constant 1 : index
    %c4_20 = arith.constant 4 : index
    %27 = vector.load %arg7[%c1_19, %c4_20] : memref<36x72xf32, #tpu.memory_space<vmem>>, vector<34x64xf32>
    %c4_21 = arith.constant 4 : index
    %c0_22 = arith.constant 0 : index
    %28 = vector.load %arg2[%c4_21, %c0_22] : memref<9x64xf32, #tpu.memory_space<vmem>>, vector<1x64xf32>
    %29 = vector.broadcast %28 : vector<1x64xf32> to vector<34x64xf32>
    %30 = arith.mulf %27, %29 : vector<34x64xf32>
    %31 = arith.addf %26, %30 : vector<34x64xf32>
    %c1_23 = arith.constant 1 : index
    %c8_24 = arith.constant 8 : index
    %32 = vector.load %arg7[%c1_23, %c8_24] : memref<36x72xf32, #tpu.memory_space<vmem>>, vector<34x64xf32>
    %c5 = arith.constant 5 : index
    %c0_25 = arith.constant 0 : index
    %33 = vector.load %arg2[%c5, %c0_25] : memref<9x64xf32, #tpu.memory_space<vmem>>, vector<1x64xf32>
    %34 = vector.broadcast %33 : vector<1x64xf32> to vector<34x64xf32>
    %35 = arith.mulf %32, %34 : vector<34x64xf32>
    %36 = arith.addf %31, %35 : vector<34x64xf32>
    %c2_26 = arith.constant 2 : index
    %c0_27 = arith.constant 0 : index
    %37 = vector.load %arg7[%c2_26, %c0_27] : memref<36x72xf32, #tpu.memory_space<vmem>>, vector<34x64xf32>
    %c6 = arith.constant 6 : index
    %c0_28 = arith.constant 0 : index
    %38 = vector.load %arg2[%c6, %c0_28] : memref<9x64xf32, #tpu.memory_space<vmem>>, vector<1x64xf32>
    %39 = vector.broadcast %38 : vector<1x64xf32> to vector<34x64xf32>
    %40 = arith.mulf %37, %39 : vector<34x64xf32>
    %41 = arith.addf %36, %40 : vector<34x64xf32>
    %c2_29 = arith.constant 2 : index
    %c4_30 = arith.constant 4 : index
    %42 = vector.load %arg7[%c2_29, %c4_30] : memref<36x72xf32, #tpu.memory_space<vmem>>, vector<34x64xf32>
    %c7 = arith.constant 7 : index
    %c0_31 = arith.constant 0 : index
    %43 = vector.load %arg2[%c7, %c0_31] : memref<9x64xf32, #tpu.memory_space<vmem>>, vector<1x64xf32>
    %44 = vector.broadcast %43 : vector<1x64xf32> to vector<34x64xf32>
    %45 = arith.mulf %42, %44 : vector<34x64xf32>
    %46 = arith.addf %41, %45 : vector<34x64xf32>
    %c2_32 = arith.constant 2 : index
    %c8_33 = arith.constant 8 : index
    %47 = vector.load %arg7[%c2_32, %c8_33] : memref<36x72xf32, #tpu.memory_space<vmem>>, vector<34x64xf32>
    %c8_34 = arith.constant 8 : index
    %c0_35 = arith.constant 0 : index
    %48 = vector.load %arg2[%c8_34, %c0_35] : memref<9x64xf32, #tpu.memory_space<vmem>>, vector<1x64xf32>
    %49 = vector.broadcast %48 : vector<1x64xf32> to vector<34x64xf32>
    %50 = arith.mulf %47, %49 : vector<34x64xf32>
    %51 = arith.addf %46, %50 : vector<34x64xf32>
    %c0_36 = arith.constant 0 : index
    %c0_37 = arith.constant 0 : index
    %52 = vector.load %arg4[%c0_36, %c0_37] : memref<1x64xf32, #tpu.memory_space<vmem>>, vector<1x64xf32>
    %53 = vector.broadcast %52 : vector<1x64xf32> to vector<34x64xf32>
    %54 = arith.addf %51, %53 : vector<34x64xf32>
    %cst_38 = arith.constant 0.000000e+00 : f32
    %55 = vector.broadcast %cst_38 : f32 to vector<34x64xf32>
    %56 = arith.maximumf %54, %55 : vector<34x64xf32>
    %57 = vector.extract_strided_slice %56 {offsets = [0, 0], sizes = [16, 64], strides = [1, 1]} : vector<34x64xf32> to vector<16x64xf32>
    %c0_39 = arith.constant 0 : index
    %c0_40 = arith.constant 0 : index
    %58 = vector.load %arg8[%c0_39, %c0_40] : memref<32x64xf32, #tpu.memory_space<vmem>>, vector<16x64xf32>
    tpu.vector_store %arg8[%c0_39, %c0_40], %57 {strides = array<i32>} : memref<32x64xf32, #tpu.memory_space<vmem>>, vector<16x64xf32>,
    %59 = vector.extract_strided_slice %56 {offsets = [18, 0], sizes = [16, 64], strides = [1, 1]} : vector<34x64xf32> to vector<16x64xf32>
    %c16_41 = arith.constant 16 : index
    %c0_42 = arith.constant 0 : index
    %60 = vector.load %arg8[%c16_41, %c0_42] : memref<32x64xf32, #tpu.memory_space<vmem>>, vector<16x64xf32>
    tpu.vector_store %arg8[%c16_41, %c0_42], %59 {strides = array<i32>} : memref<32x64xf32, #tpu.memory_space<vmem>>, vector<16x64xf32>,
    %c0_43 = arith.constant 0 : index
    %c0_44 = arith.constant 0 : index
    %61 = vector.load %arg8[%c0_43, %c0_44] : memref<32x64xf32, #tpu.memory_space<vmem>>, vector<32x64xf32>
    %62 = arith.truncf %61 : vector<32x64xf32> to vector<32x64xbf16>
    %c0_45 = arith.constant 0 : index
    %c0_46 = arith.constant 0 : index
    %63 = vector.load %arg3[%c0_45, %c0_46] : memref<64x128xbf16, #tpu.memory_space<vmem>>, vector<64x128xbf16>
    %cst_47 = arith.constant dense<0.000000e+00> : vector<32x128xf32>
    %64 = tpu.matmul %62, %63, %cst_47 {dimension_numbers = #tpu.dot_dimension_numbers<[1], [0], [0], [1], [0, 0, 1, 1], [], []>} : vector<32x64xbf16>, vector<64x128xbf16>, vector<32x128xf32> -> vector<32x128xf32>
    %c0_48 = arith.constant 0 : index
    %c0_49 = arith.constant 0 : index
    %65 = vector.load %arg5[%c0_48, %c0_49] : memref<1x128xf32, #tpu.memory_space<vmem>>, vector<1x128xf32>
    %66 = vector.broadcast %65 : vector<1x128xf32> to vector<32x128xf32>
    %67 = arith.addf %64, %66 : vector<32x128xf32>
    %cst_50 = arith.constant 0.000000e+00 : f32
    %68 = vector.broadcast %cst_50 : f32 to vector<32x128xf32>
    %69 = arith.maximumf %67, %68 : vector<32x128xf32>
    %c0_51 = arith.constant 0 : index
    %c0_52 = arith.constant 0 : index
    %70 = vector.load %arg6[%c0_51, %c0_52] : memref<32x128xf32, #tpu.memory_space<vmem>>, vector<32x128xf32>
    tpu.vector_store %arg6[%c0_51, %c0_52], %69 {strides = array<i32>} : memref<32x128xf32, #tpu.memory_space<vmem>>, vector<32x128xf32>,
    return
  }
  func.func @transform_0(%arg0: i32) -> (i32, i32) {
    %c0_i32 = arith.constant 0 : i32
    %c0_i32_0 = arith.constant 0 : i32
    %c0_i32_1 = arith.constant 0 : i32
    return %c0_i32, %c0_i32_0 : i32, i32
  }
  func.func @transform_1(%arg0: i32) -> (i32, i32) {
    %c0_i32 = arith.constant 0 : i32
    %c0_i32_0 = arith.constant 0 : i32
    %c0_i32_1 = arith.constant 0 : i32
    return %c0_i32, %c0_i32_0 : i32, i32
  }
  func.func @transform_2(%arg0: i32) -> (i32, i32) {
    %c0_i32 = arith.constant 0 : i32
    %c0_i32_0 = arith.constant 0 : i32
    %c0_i32_1 = arith.constant 0 : i32
    return %c0_i32, %c0_i32_0 : i32, i32
  }
  func.func @transform_3(%arg0: i32) -> (i32, i32) {
    %c0_i32 = arith.constant 0 : i32
    %c0_i32_0 = arith.constant 0 : i32
    %c0_i32_1 = arith.constant 0 : i32
    return %c0_i32, %c0_i32_0 : i32, i32
  }
  func.func @transform_4(%arg0: i32) -> (i32, i32) {
    %c0_i32 = arith.constant 0 : i32
    %c0_i32_0 = arith.constant 0 : i32
    %c0_i32_1 = arith.constant 0 : i32
    return %c0_i32, %c0_i32_0 : i32, i32
  }
  func.func @transform_5(%arg0: i32) -> (i32, i32) {
    %c0_i32 = arith.constant 0 : i32
    %c0_i32_0 = arith.constant 0 : i32
    %c0_i32_1 = arith.constant 0 : i32
    return %c0_i32, %c0_i32_0 : i32, i32
  }
}

</mosaic_0001>

<llo_original>
// kernel: tpu_custom_call.1
$region0: #{tpu_custom_call.1}
  #allocation0 [shape = 'u32[]', space=smem, size = 0x4, offset = 0x4, fixed_abs, tag = 'smem constant byte address 0x4 - core index']
  #allocation1 [shape = 'u32[72,128]{1,0:T(1,128)}', space=vmem, size = 0x9000, scoped, tag = 'internal scratch']
  #allocation2 [shape = 'f32[36,72]{1,0:T(8,128)}', space=vmem, size = 0x5000, scoped, tag = 'scratch operand']
  #allocation3 [shape = 'f32[32,64]{1,0:T(8,128)}', space=vmem, size = 0x4000, scoped, tag = 'scratch operand']
  %s0 = inlined_call_operand.hbm [shape: f32[32,64], index: 0, kind: input, shape index: {}]
  %s1 = inlined_call_operand.hbm [shape: f32[9,64], index: 1, kind: input, shape index: {}]
  %s2 = inlined_call_operand.hbm [shape: bf16[64,128], index: 2, kind: input, shape index: {}]
  %s3 = inlined_call_operand.vmem [shape: f32[1,64], index: 3, kind: input, shape index: {}]
  %s4 = inlined_call_operand.vmem [shape: f32[1,128], index: 4, kind: input, shape index: {}]
  %s5 = inlined_call_operand.hbm [shape: f32[32,128], index: 5, kind: output, shape index: {}]
  %s6 = sld [smem:[#allocation0]]
  $region42: #{tpu_custom_call.1} parent=0
    _
  %s8 = ssub.s32 1, %s6
  %s9 = scalar_select 0, %s8, %s6
  $region1: #{tpu_custom_call.1} parent=0
    #allocation4 [shape = 'u8[16384]{0}', space=vmem, size = 0x4000, scoped, tag = 'input window, operand 0, single buffered']
    #allocation5 [shape = 's32[1]{0}', space=sflag, size = 0x4, scoped, tag = 'scoped memory for tpu_custom_call.1']
    #allocation6 [shape = 's32[1]{0}', space=sflag, size = 0x4, scoped, tag = 'scoped memory for tpu_custom_call.1']
    #allocation7 [shape = 'u8[8192]{0}', space=vmem, size = 0x2000, scoped, tag = 'input window, operand 1, single buffered']
    #allocation8 [shape = 's32[1]{0}', space=sflag, size = 0x4, scoped, tag = 'scoped memory for tpu_custom_call.1']
    #allocation9 [shape = 'u8[16384]{0}', space=vmem, size = 0x4000, scoped, tag = 'input window, operand 2, single buffered']
    #allocation10 [shape = 'u8[16384]{0}', space=vmem, size = 0x4000, scoped, tag = 'output window, operand 0, single buffered']
    %10 = vsyncpa [#allocation5], 0
    %11 = vsyncpa [#allocation8], 0
    %12 = vsyncpa [#allocation6], 0
    // Predicated region
    $region2: #{tpu_custom_call.1} parent=1 // pred_check
      _
    $region3: #{tpu_custom_call.1} parent=1 // pred_check_branch
      %14 = sbr.rel (0) target = $region5
    $region4: #{tpu_custom_call.1} parent=1 // pred_region
      %16 = vsyncadd [#allocation5], 0
      %s17 = sshll.u32 %s0, 4
      %s18 = int_to_ptr.hbm [resolvable:$true] %s17
      %s19 = sshll.u32 [#allocation4], 4
      %s20 = int_to_ptr.vmem [resolvable:$true] %s19
      %25 = dma.hbm_to_vmem [thread:$0]  %s18, 512, %s20, [#allocation5], 128, 128, 8
    $region5: #{tpu_custom_call.1} parent=1 // pred_fallthru
      _
    // Predicated region
    $region6: #{tpu_custom_call.1} parent=1 // pred_check
      _
    $region7: #{tpu_custom_call.1} parent=1 // pred_check_branch
      %27 = sbr.rel (0) target = $region9
    $region8: #{tpu_custom_call.1} parent=1 // pred_region
      %29 = vsyncadd [#allocation8], 0
      %s30 = sshll.u32 %s1, 4
      %s31 = int_to_ptr.hbm [resolvable:$true] %s30
      %s32 = sshll.u32 [#allocation7], 4
      %s33 = int_to_ptr.vmem [resolvable:$true] %s32
      %38 = dma.hbm_to_vmem [thread:$0]  %s31, 256, %s33, [#allocation8], 128, 128, 8
    $region9: #{tpu_custom_call.1} parent=1 // pred_fallthru
      _
    // Predicated region
    $region10: #{tpu_custom_call.1} parent=1 // pred_check
      _
    $region11: #{tpu_custom_call.1} parent=1 // pred_check_branch
      %40 = sbr.rel (0) target = $region13
    $region12: #{tpu_custom_call.1} parent=1 // pred_region
      %42 = vsyncadd [#allocation8], 0
      %s43 = sshll.u32 %s2, 4
      %s44 = int_to_ptr.hbm [resolvable:$true] %s43
      %s45 = sshll.u32 [#allocation9], 4
      %s46 = int_to_ptr.vmem [resolvable:$true] %s45
      %51 = dma.hbm_to_vmem [thread:$0]  %s44, 512, %s46, [#allocation8], 64, 64, 4
    $region13: #{tpu_custom_call.1} parent=1 // pred_fallthru
      _
    // Predicated region
    $region14: #{tpu_custom_call.1} parent=1 // pred_check
      _
    $region15: #{tpu_custom_call.1} parent=1 // pred_check_branch
      %53 = sbr.rel (0) target = $region17
    $region16: #{tpu_custom_call.1} parent=1 // pred_region
      _
    $region17: #{tpu_custom_call.1} parent=1 // pred_fallthru
      _
    // Predicated region
    $region18: #{tpu_custom_call.1} parent=1 // pred_check
      _
    $region19: #{tpu_custom_call.1} parent=1 // pred_check_branch
      %55 = sbr.rel (0) target = $region21
    $region20: #{tpu_custom_call.1} parent=1 // pred_region
      _
    $region21: #{tpu_custom_call.1} parent=1 // pred_fallthru
      _
    // Predicated region
    $region22: #{tpu_custom_call.1} parent=1 // pred_check
      _
    $region23: #{tpu_custom_call.1} parent=1 // pred_check_branch
      %57 = sbr.rel (0) target = $region25
    $region24: #{tpu_custom_call.1} parent=1 // pred_region
      %59 = dma.done [#allocation5], 512
    $region25: #{tpu_custom_call.1} parent=1 // pred_fallthru
      _
    // Predicated region
    $region26: #{tpu_custom_call.1} parent=1 // pred_check
      _
    $region27: #{tpu_custom_call.1} parent=1 // pred_check_branch
      %61 = sbr.rel (0) target = $region29
    $region28: #{tpu_custom_call.1} parent=1 // pred_region
      %63 = dma.done [#allocation8], 256
    $region29: #{tpu_custom_call.1} parent=1 // pred_fallthru
      _
    // Predicated region
    $region30: #{tpu_custom_call.1} parent=1 // pred_check
      _
    $region31: #{tpu_custom_call.1} parent=1 // pred_check_branch
      %65 = sbr.rel (0) target = $region33
    $region32: #{tpu_custom_call.1} parent=1 // pred_region
      %67 = dma.done [#allocation8], 512
    $region33: #{tpu_custom_call.1} parent=1 // pred_fallthru
      _
    %vm69 = vcmask 588800
    %70 = vst.msk [vmem:[#allocation2] sm:$0xff] %vm69, 0.0
    %71 = vst.msk [vmem:[#allocation2 + $0x8] sm:$0xff] %vm69, 0.0
    %72 = vst.msk [vmem:[#allocation2 + $0x10] sm:$0xff] %vm69, 0.0
    %73 = vst.msk [vmem:[#allocation2 + $0x18] sm:$0xff] %vm69, 0.0
    %vm74 = vcmask 584704
    %75 = vst.msk [vmem:[#allocation2 + $0x20] sm:$0xf] %vm74, 0.0
    %v76 = vld [vmem:[#allocation4] sm:$0xff]
    %v77 = vld [vmem:[#allocation4 + $0x8] sm:$0xff]
    %80 = vrot.lane.b32.xlu0 %v76, 4
    %v81 = vpop.permute.xlu0 %80
    %82 = vrot.lane.b32.xlu0 %v77, 4
    %v83 = vpop.permute.xlu0 %82
    %vm86 = vcmask 556064
    %87 = vst.msk [vmem:[#allocation2 + $0x1] sm:$0xff] %vm86, %v81
    %88 = vst.msk [vmem:[#allocation2 + $0x9] sm:$0xff] %vm86, %v83
    %v89 = vld [vmem:[#allocation4 + $0x10] sm:$0xff]
    %v90 = vld [vmem:[#allocation4 + $0x18] sm:$0xff]
    %93 = vrot.lane.b32.xlu0 %v89, 4
    %v94 = vpop.permute.xlu0 %93
    %95 = vrot.lane.b32.xlu0 %v90, 4
    %v96 = vpop.permute.xlu0 %95
    %99 = vst.msk [vmem:[#allocation2 + $0x13] sm:$0xff] %vm86, %v94
    %100 = vst.msk [vmem:[#allocation2 + $0x1b] sm:$0xff] %vm86, %v96
    %v101 = vld [vmem:[#allocation2] sm:$0xff]
    %v102 = vld [vmem:[#allocation2 + $0x8] sm:$0xff]
    %v103 = vld [vmem:[#allocation2 + $0x10] sm:$0xff]
    %v104 = vld [vmem:[#allocation2 + $0x18] sm:$0xff]
    %v105 = vld [vmem:[#allocation2 + $0x20] sm:$0x3]
    %v106 = vld [vmem:[#allocation7] sm:$0x1]
    %v107 = vperm.slane %v106, 0
    %v108 = vmul.f32 %v101, %v107
    %v109 = vmul.f32 %v102, %v107
    %v110 = vmul.f32 %v103, %v107
    %v111 = vmul.f32 %v104, %v107
    %v112 = vmul.f32 %v105, %v107
    %v113 = vadd.f32 %v108, 0.0
    %v114 = vadd.f32 %v109, 0.0
    %v115 = vadd.f32 %v110, 0.0
    %v116 = vadd.f32 %v111, 0.0
    %v117 = vadd.f32 %v112, 0.0
    %v118 = vld [vmem:[#allocation7 + $0x1] sm:$0x1]
    %v119 = vperm.slane %v118, 0
    %121 = vrot.lane.b32.xlu0 %v119, 4
    %v122 = vpop.permute.xlu0 %121
    %v124 = vmul.f32 %v101, %v122
    %v125 = vmul.f32 %v102, %v122
    %v126 = vmul.f32 %v103, %v122
    %v127 = vmul.f32 %v104, %v122
    %v128 = vmul.f32 %v105, %v122
    %134 = vrot.lane.b32.xlu0 %v124, 124
    %v135 = vpop.permute.xlu0 %134
    %136 = vrot.lane.b32.xlu0 %v125, 124
    %v137 = vpop.permute.xlu0 %136
    %138 = vrot.lane.b32.xlu0 %v126, 124
    %v139 = vpop.permute.xlu0 %138
    %140 = vrot.lane.b32.xlu0 %v127, 124
    %v141 = vpop.permute.xlu0 %140
    %142 = vrot.lane.b32.xlu0 %v128, 124
    %v143 = vpop.permute.xlu0 %142
    %v149 = vadd.f32 %v113, %v135
    %v150 = vadd.f32 %v114, %v137
    %v151 = vadd.f32 %v115, %v139
    %v152 = vadd.f32 %v116, %v141
    %v153 = vadd.f32 %v117, %v143
    %v154 = vld [vmem:[#allocation7 + $0x2] sm:$0x1]
    %v155 = vperm.slane %v154, 0
    %157 = vrot.lane.b32.xlu0 %v155, 8
    %v158 = vpop.permute.xlu0 %157
    %v160 = vmul.f32 %v101, %v158
    %v161 = vmul.f32 %v102, %v158
    %v162 = vmul.f32 %v103, %v158
    %v163 = vmul.f32 %v104, %v158
    %v164 = vmul.f32 %v105, %v158
    %170 = vrot.lane.b32.xlu0 %v160, 120
    %v171 = vpop.permute.xlu0 %170
    %172 = vrot.lane.b32.xlu0 %v161, 120
    %v173 = vpop.permute.xlu0 %172
    %174 = vrot.lane.b32.xlu0 %v162, 120
    %v175 = vpop.permute.xlu0 %174
    %176 = vrot.lane.b32.xlu0 %v163, 120
    %v177 = vpop.permute.xlu0 %176
    %178 = vrot.lane.b32.xlu0 %v164, 120
    %v179 = vpop.permute.xlu0 %178
    %v185 = vadd.f32 %v149, %v171
    %v186 = vadd.f32 %v150, %v173
    %v187 = vadd.f32 %v151, %v175
    %v188 = vadd.f32 %v152, %v177
    %v189 = vadd.f32 %v153, %v179
    %v190 = vld [vmem:[#allocation2 + $0x1] sm:$0xff]
    %v191 = vld [vmem:[#allocation2 + $0x9] sm:$0xff]
    %v192 = vld [vmem:[#allocation2 + $0x11] sm:$0xff]
    %v193 = vld [vmem:[#allocation2 + $0x19] sm:$0xff]
    %v194 = vld [vmem:[#allocation2 + $0x21] sm:$0x3]
    %v195 = vld [vmem:[#allocation7 + $0x3] sm:$0x1]
    %v196 = vperm.slane %v195, 0
    %v197 = vmul.f32 %v190, %v196
    %v198 = vmul.f32 %v191, %v196
    %v199 = vmul.f32 %v192, %v196
    %v200 = vmul.f32 %v193, %v196
    %v201 = vmul.f32 %v194, %v196
    %v202 = vadd.f32 %v185, %v197
    %v203 = vadd.f32 %v186, %v198
    %v204 = vadd.f32 %v187, %v199
    %v205 = vadd.f32 %v188, %v200
    %v206 = vadd.f32 %v189, %v201
    %v207 = vld [vmem:[#allocation7 + $0x4] sm:$0x1]
    %v208 = vperm.slane %v207, 0
    %210 = vrot.lane.b32.xlu0 %v208, 4
    %v211 = vpop.permute.xlu0 %210
    %v213 = vmul.f32 %v190, %v211
    %v214 = vmul.f32 %v191, %v211
    %v215 = vmul.f32 %v192, %v211
    %v216 = vmul.f32 %v193, %v211
    %v217 = vmul.f32 %v194, %v211
    %223 = vrot.lane.b32.xlu0 %v213, 124
    %v224 = vpop.permute.xlu0 %223
    %225 = vrot.lane.b32.xlu0 %v214, 124
    %v226 = vpop.permute.xlu0 %225
    %227 = vrot.lane.b32.xlu0 %v215, 124
    %v228 = vpop.permute.xlu0 %227
    %229 = vrot.lane.b32.xlu0 %v216, 124
    %v230 = vpop.permute.xlu0 %229
    %231 = vrot.lane.b32.xlu0 %v217, 124
    %v232 = vpop.permute.xlu0 %231
    %v238 = vadd.f32 %v202, %v224
    %v239 = vadd.f32 %v203, %v226
    %v240 = vadd.f32 %v204, %v228
    %v241 = vadd.f32 %v205, %v230
    %v242 = vadd.f32 %v206, %v232
    %v243 = vld [vmem:[#allocation7 + $0x5] sm:$0x1]
    %v244 = vperm.slane %v243, 0
    %246 = vrot.lane.b32.xlu0 %v244, 8
    %v247 = vpop.permute.xlu0 %246
    %v249 = vmul.f32 %v190, %v247
    %v250 = vmul.f32 %v191, %v247
    %v251 = vmul.f32 %v192, %v247
    %v252 = vmul.f32 %v193, %v247
    %v253 = vmul.f32 %v194, %v247
    %259 = vrot.lane.b32.xlu0 %v249, 120
    %v260 = vpop.permute.xlu0 %259
    %261 = vrot.lane.b32.xlu0 %v250, 120
    %v262 = vpop.permute.xlu0 %261
    %263 = vrot.lane.b32.xlu0 %v251, 120
    %v264 = vpop.permute.xlu0 %263
    %265 = vrot.lane.b32.xlu0 %v252, 120
    %v266 = vpop.permute.xlu0 %265
    %267 = vrot.lane.b32.xlu0 %v253, 120
    %v268 = vpop.permute.xlu0 %267
    %v274 = vadd.f32 %v238, %v260
    %v275 = vadd.f32 %v239, %v262
    %v276 = vadd.f32 %v240, %v264
    %v277 = vadd.f32 %v241, %v266
    %v278 = vadd.f32 %v242, %v268
    %v279 = vld [vmem:[#allocation2 + $0x2] sm:$0xff]
    %v280 = vld [vmem:[#allocation2 + $0xa] sm:$0xff]
    %v281 = vld [vmem:[#allocation2 + $0x12] sm:$0xff]
    %v282 = vld [vmem:[#allocation2 + $0x1a] sm:$0xff]
    %v283 = vld [vmem:[#allocation2 + $0x22] sm:$0x3]
    %v284 = vld [vmem:[#allocation7 + $0x6] sm:$0x1]
    %v285 = vperm.slane %v284, 0
    %v286 = vmul.f32 %v279, %v285
    %v287 = vmul.f32 %v280, %v285
    %v288 = vmul.f32 %v281, %v285
    %v289 = vmul.f32 %v282, %v285
    %v290 = vmul.f32 %v283, %v285
    %v291 = vadd.f32 %v274, %v286
    %v292 = vadd.f32 %v275, %v287
    %v293 = vadd.f32 %v276, %v288
    %v294 = vadd.f32 %v277, %v289
    %v295 = vadd.f32 %v278, %v290
    %v296 = vld [vmem:[#allocation7 + $0x7] sm:$0x1]
    %v297 = vperm.slane %v296, 0
    %299 = vrot.lane.b32.xlu0 %v297, 4
    %v300 = vpop.permute.xlu0 %299
    %v302 = vmul.f32 %v279, %v300
    %v303 = vmul.f32 %v280, %v300
    %v304 = vmul.f32 %v281, %v300
    %v305 = vmul.f32 %v282, %v300
    %v306 = vmul.f32 %v283, %v300
    %312 = vrot.lane.b32.xlu0 %v302, 124
    %v313 = vpop.permute.xlu0 %312
    %314 = vrot.lane.b32.xlu0 %v303, 124
    %v315 = vpop.permute.xlu0 %314
    %316 = vrot.lane.b32.xlu0 %v304, 124
    %v317 = vpop.permute.xlu0 %316
    %318 = vrot.lane.b32.xlu0 %v305, 124
    %v319 = vpop.permute.xlu0 %318
    %320 = vrot.lane.b32.xlu0 %v306, 124
    %v321 = vpop.permute.xlu0 %320
    %v327 = vadd.f32 %v291, %v313
    %v328 = vadd.f32 %v292, %v315
    %v329 = vadd.f32 %v293, %v317
    %v330 = vadd.f32 %v294, %v319
    %v331 = vadd.f32 %v295, %v321
    %v332 = vld [vmem:[#allocation7 + $0x8] sm:$0x1]
    %v333 = vperm.slane %v332, 0
    %335 = vrot.lane.b32.xlu0 %v333, 8
    %v336 = vpop.permute.xlu0 %335
    %v338 = vmul.f32 %v279, %v336
    %v339 = vmul.f32 %v280, %v336
    %v340 = vmul.f32 %v281, %v336
    %v341 = vmul.f32 %v282, %v336
    %v342 = vmul.f32 %v283, %v336
    %348 = vrot.lane.b32.xlu0 %v338, 120
    %v349 = vpop.permute.xlu0 %348
    %350 = vrot.lane.b32.xlu0 %v339, 120
    %v351 = vpop.permute.xlu0 %350
    %352 = vrot.lane.b32.xlu0 %v340, 120
    %v353 = vpop.permute.xlu0 %352
    %354 = vrot.lane.b32.xlu0 %v341, 120
    %v355 = vpop.permute.xlu0 %354
    %356 = vrot.lane.b32.xlu0 %v342, 120
    %v357 = vpop.permute.xlu0 %356
    %v363 = vadd.f32 %v327, %v349
    %v364 = vadd.f32 %v328, %v351
    %v365 = vadd.f32 %v329, %v353
    %v366 = vadd.f32 %v330, %v355
    %v367 = vadd.f32 %v331, %v357
    %v368 = vld [vmem:[%s3] sm:$0x1]
    %v370 = vperm.slane %v368, 0
    %v372 = vadd.f32 %v363, %v370
    %v373 = vadd.f32 %v364, %v370
    %v374 = vadd.f32 %v365, %v370
    %v375 = vadd.f32 %v366, %v370
    %v376 = vadd.f32 %v367, %v370
    %v377 = vmax.f32 %v372, 0.0
    %v378 = vmax.f32 %v373, 0.0
    %v379 = vmax.f32 %v374, 0.0
    %v380 = vmax.f32 %v375, 0.0
    %v381 = vmax.f32 %v376, 0.0
    %vm382 = vcmask 523264
    %383 = vst.msk [vmem:[#allocation3] sm:$0xff] %vm382, %v377
    %384 = vst.msk [vmem:[#allocation3 + $0x8] sm:$0xff] %vm382, %v378
    %vm385 = vcmask 523266
    %386 = vst.msk [vmem:[#allocation3 + $0xe] sm:$0xfc] %vm385, %v379
    %387 = vst.msk [vmem:[#allocation3 + $0x16] sm:$0xff] %vm382, %v380
    %vm388 = vcmask 517120
    %389 = vst.msk [vmem:[#allocation3 + $0x1e] sm:$0x3] %vm388, %v381
    %v390 = vld [vmem:[#allocation3] sm:$0xff]
    %v391 = vld [vmem:[#allocation3 + $0x8] sm:$0xff]
    %v392 = vld [vmem:[#allocation3 + $0x10] sm:$0xff]
    %v393 = vld [vmem:[#allocation3 + $0x18] sm:$0xff]
    %v394 = vpack.c.bf16 %v391, %v390
    %v395 = vpack.c.bf16 %v393, %v392
    %v396 = vld [vmem:[#allocation9] sm:$0xf]
    %v397 = vld [vmem:[#allocation9 + $0x4] sm:$0xf]
    %v398 = vld [vmem:[#allocation9 + $0x8] sm:$0xf]
    %v399 = vld [vmem:[#allocation9 + $0xc] sm:$0xf]
    %v400 = vld [vmem:[#allocation9 + $0x10] sm:$0xf]
    %v401 = vld [vmem:[#allocation9 + $0x14] sm:$0xf]
    %v402 = vld [vmem:[#allocation9 + $0x18] sm:$0xf]
    %v403 = vld [vmem:[#allocation9 + $0x1c] sm:$0xf]
    %v404 = vld [vmem:[%s4] sm:$0x1]
    %v406 = vperm.slane %v404, 0
    %v416 = vunpack.c.l.b16 %v396
    %v417 = vunpack.c.l.b16 %v397
    %v418 = vunpack.c.l.b16 %v398
    %v419 = vunpack.c.l.b16 %v399
    %v420 = vunpack.c.l.b16 %v400
    %v421 = vunpack.c.l.b16 %v401
    %v422 = vunpack.c.l.b16 %v402
    %v423 = vunpack.c.l.b16 %v403
    %v424 = vpack.c.b16 %v417, %v416
    %v425 = vpack.c.b16 %v419, %v418
    %v426 = vpack.c.b16 %v421, %v420
    %v427 = vpack.c.b16 %v423, %v422
    %v433 = vsel %vm382, %v394, 0
    %v436 = vsel %vm382, %v395, 0
    %438 = vmatpush.bf16.msra.mxu0 0
    %439 = vmatpush.bf16.msra.mxu0 0
    %440 = vmatpush.bf16.msra.mxu0 0
    %441 = vmatpush.bf16.msra.mxu0 0
    %442 = vmatpush.bf16.msra.mxu0 %v427
    %443 = vmatpush.bf16.msra.mxu0 %v426
    %444 = vmatpush.bf16.msra.mxu0 %v425
    %445 = vmatpush.bf16.msra.mxu0 %v424
    %446 = vmatmul.bf16.gmra.mxu0 %v433
    %v447 = vpop.f32.mrf.mxu0
    %v448 = vadd.f32 %v406, %v447
    %v449 = vpop.f32.mrf.mxu0
    %v450 = vadd.f32 %v406, %v449
    %451 = vmatmul.bf16.gmra.mxu0 %v436
    %v452 = vpop.f32.mrf.mxu0
    %v453 = vadd.f32 %v406, %v452
    %v454 = vpop.f32.mrf.mxu0
    %v455 = vadd.f32 %v406, %v454
    %456 = vdwg.mxu0
    %v457 = vmax.f32 %v448, 0.0
    %v458 = vmax.f32 %v450, 0.0
    %v459 = vmax.f32 %v453, 0.0
    %v460 = vmax.f32 %v455, 0.0
    %461 = vst [vmem:[#allocation10] sm:$0xff] %v457
    %462 = vst [vmem:[#allocation10 + $0x8] sm:$0xff] %v458
    %463 = vst [vmem:[#allocation10 + $0x10] sm:$0xff] %v459
    %464 = vst [vmem:[#allocation10 + $0x18] sm:$0xff] %v460
    // Predicated region
    $region34: #{tpu_custom_call.1} parent=1 // pred_check
      _
    $region35: #{tpu_custom_call.1} parent=1 // pred_check_branch
      %466 = sbr.rel (0) target = $region37
    $region36: #{tpu_custom_call.1} parent=1 // pred_region
      %468 = vsyncadd [#allocation6], 0
      %s469 = sshll.u32 [#allocation10], 4
      %s470 = int_to_ptr.vmem [resolvable:$true] %s469
      %s471 = sshll.u32 %s5, 4
      %s472 = int_to_ptr.hbm [resolvable:$true] %s471
      %477 = dma.vmem_to_hbm [thread:$0]  %s470, 512, %s472, [#allocation6], 128, 128, 8
    $region37: #{tpu_custom_call.1} parent=1 // pred_fallthru
      _
    // Predicated region
    $region38: #{tpu_custom_call.1} parent=1 // pred_check
      _
    $region39: #{tpu_custom_call.1} parent=1 // pred_check_branch
      %479 = sbr.rel (0) target = $region41
    $region40: #{tpu_custom_call.1} parent=1 // pred_region
      %481 = dma.done [#allocation6], 512
    $region41: #{tpu_custom_call.1} parent=1 // pred_fallthru
      _
    %482 = vsyncpa [#allocation5], 1
    %483 = vsyncpa [#allocation8], 1
    %484 = vsyncpa [#allocation6], 1

</llo_original>
